<compile_context>
chip_gen: v6e
topology: v6e:2x2x1
jax: 0.10.0
libtpu: 0.0.40
codegen_flags: <defaults>
</compile_context>

<pallas_src>
import functools

import jax
import jax.numpy as jnp
from jax.experimental import pallas as pl
from jax.experimental.pallas import tpu as pltpu

BN_EPS = 1e-5
LANE = 128       # lane width (last dim)
SUBLANE = 8      # f32 sublane granule (batch padding)
K_ALIGN = 16     # bf16 sublane granule (weight K padding -> clean slab slices)


def _round_up(n, m):
    return (n + m - 1) // m * m


# --------------------------------------------------------------------------
# Kernel: full trunk + fused heads in one pallas_call (everything VMEM-resident)
# --------------------------------------------------------------------------
def _mlp_kernel(n_batch, k_offs, k_sizes, x_ref, w_ref, v_ref, o_ref):
    """Fused trunk + fused (linear | linear_main) sigmoid head.

    x_ref : (B_pad, K0)           padded input activations (f32)
    w_ref : (sum_k K_k_pad, 128)  bf16 K-packed weight slab; layer k lives at
                                  sublane rows [k_offs[k], k_offs[k]+k_sizes[k])
    v_ref : (3*n_hidden + 1, 128) f32 rows = [b_k, gamma_k, beta_k]*n_hidden,
                                  then fused head bias (b_lin | b_main)
    o_ref : (B_pad, 128)          lanes [0:out) = linear head,
                                  lanes [out:2*out) = linear_main head
    """
    n_hidden = len(k_sizes) - 1
    x = x_ref[...].astype(jnp.float32)
    b_pad = x.shape[0]
    v = v_ref[...]

    inv_n = jnp.float32(1.0 / n_batch)
    if n_batch != b_pad:
        # Padded batch rows must not contribute to BN batch statistics.
        row_ids = jax.lax.broadcasted_iota(jnp.int32, (b_pad, 1), 0)
        row_mask = (row_ids < n_batch).astype(jnp.float32)
    else:
        row_mask = None

    # Static unroll is fine at this depth (2 hidden layers).
    for k in range(n_hidden):
        off, ksz = k_offs[k], k_sizes[k]
        w = w_ref[off:off + ksz, :]                 # bf16 (ksz, 128) static slice
        b = v[3 * k: 3 * k + 1, :]
        gamma = v[3 * k + 1: 3 * k + 2, :]
        beta = v[3 * k + 2: 3 * k + 3, :]

        # Linear + ReLU: bf16 operands on the MXU, f32 accumulate.
        lhs = x[:, :ksz].astype(jnp.bfloat16)
        y = jnp.dot(lhs, w, preferred_element_type=jnp.float32) + b
        y = jnp.maximum(y, 0.0)

        # BatchNorm1d (train mode, biased variance), two-pass for stability.
        ym = y if row_mask is None else y * row_mask
        mean = jnp.sum(ym, axis=0, keepdims=True) * inv_n
        cent = y - mean
        cm = cent if row_mask is None else cent * row_mask
        var = jnp.sum(cm * cm, axis=0, keepdims=True) * inv_n
        scale = gamma * jax.lax.rsqrt(var + BN_EPS)        # rsqrt -> EUP
        shift = beta - mean * scale
        x = y * scale + shift                              # (padded lanes stay 0)

    # Fused heads: linear in lanes [0:out), linear_main in [out:2*out).
    off, ksz = k_offs[n_hidden], k_sizes[n_hidden]
    w_head = w_ref[off:off + ksz, :]
    b_head = v[3 * n_hidden: 3 * n_hidden + 1, :]
    lhs = x[:, :ksz].astype(jnp.bfloat16)
    logits = jnp.dot(lhs, w_head, preferred_element_type=jnp.float32) + b_head
    o_ref[...] = jax.nn.sigmoid(logits).astype(o_ref.dtype)


# --------------------------------------------------------------------------
# One-time parameter packing (hoisted out of the forward path)
# --------------------------------------------------------------------------
def pack_params(params):
    """Pad/pack every parameter ONCE into two device operands + static metadata."""
    hidden = params["hidden"]                       # list of (w_T, b, gamma, beta)
    w_lin, b_lin = params["linear"]
    w_main, b_main = params["linear_main"]
    out_dim = int(w_lin.shape[1])
    n_hidden = len(hidden)
    assert 2 * out_dim <= LANE, "fused-head packing requires 2*out_size <= 128"

    k_sizes, w_blocks, real_dims = [], [], []
    for (w, _, _, _) in hidden:
        k_in, k_out = int(w.shape[0]), int(w.shape[1])
        assert k_out <= LANE, "hidden width must fit one 128-lane tile"
        kp = _round_up(k_in, K_ALIGN)
        w_blocks.append(jnp.pad(w.astype(jnp.bfloat16),
                                ((0, kp - k_in), (0, LANE - k_out))))
        k_sizes.append(kp)
        real_dims.append((k_in, k_out))

    # Fused head weight: [w_lin | w_main] packed along lanes.
    k_in = int(w_lin.shape[0])
    kp = _round_up(k_in, K_ALIGN)
    w_head = jnp.concatenate([w_lin, w_main], axis=1)            # (k_in, 2*out)
    w_blocks.append(jnp.pad(w_head.astype(jnp.bfloat16),
                            ((0, kp - k_in), (0, LANE - 2 * out_dim))))
    k_sizes.append(kp)
    real_dims.append((k_in, 2 * out_dim))

    k_offs = [0]
    for s in k_sizes[:-1]:
        k_offs.append(k_offs[-1] + s)
    w_slab = jnp.concatenate(w_blocks, axis=0)                   # (sum K_pad, 128) bf16

    rows = []
    for (_, b, g, bt) in hidden:
        rows += [b.reshape(1, -1), g.reshape(1, -1), bt.reshape(1, -1)]
    rows.append(jnp.concatenate([b_lin.reshape(1, -1), b_main.reshape(1, -1)], axis=1))
    v_slab = jnp.concatenate(
        [jnp.pad(r.astype(jnp.float32), ((0, 0), (0, LANE - r.shape[1]))) for r in rows],
        axis=0)                                                  # (3*nh+1, 128) f32

    return dict(w=w_slab, v=v_slab,
                k_offs=tuple(k_offs), k_sizes=tuple(k_sizes),
                out_dim=out_dim, real_dims=tuple(real_dims),
                n_hidden=n_hidden)


# --------------------------------------------------------------------------
# Forward
# --------------------------------------------------------------------------
@functools.partial(jax.jit,
                   static_argnames=("k_offs", "k_sizes", "out_dim", "real_dims"))
def _forward_packed(x, w_slab, v_slab, *, k_offs, k_sizes, out_dim, real_dims):
    batch, in_dim = x.shape
    n_hidden = len(k_sizes) - 1
    b_pad = _round_up(batch, SUBLANE)
    k0 = k_sizes[0]

    x_p = x.astype(jnp.float32)
    if (b_pad, k0) != (batch, in_dim):
        x_p = jnp.pad(x_p, ((0, b_pad - batch), (0, k0 - in_dim)))

    # Cost estimate from REAL (unpadded) dims so XLA schedules this as tiny.
    flops = sum(2 * batch * i * o for (i, o) in real_dims)
    transc = sum(o for (_, o) in real_dims[:n_hidden]) + batch * real_dims[-1][1]
    cost = pl.CostEstimate(
        flops=flops,
        transcendentals=transc,
        bytes_accessed=(x_p.size * 4 + w_slab.size * 2 + v_slab.size * 4
                        + b_pad * LANE * 4),
    )

    vmem = pl.BlockSpec(memory_space=pltpu.MemorySpace.VMEM)
    out = pl.pallas_call(
        functools.partial(_mlp_kernel, batch, k_offs, k_sizes),
        out_shape=jax.ShapeDtypeStruct((b_pad, LANE), jnp.float32),
        in_specs=[vmem, vmem, vmem],
        out_specs=vmem,
        cost_estimate=cost,
    )(x_p, w_slab, v_slab)

    # Padded rows / lanes are layout plumbing only -> slice both heads out.
    return out[:batch, :out_dim], out[:batch, out_dim:2 * out_dim]


def net_forward_both(x, packed):
    """sigmoid(linear(trunk(x))) AND sigmoid(linear_main(trunk(x)))."""
    return _forward_packed(x, packed["w"], packed["v"],
                           k_offs=packed["k_offs"], k_sizes=packed["k_sizes"],
                           out_dim=packed["out_dim"], real_dims=packed["real_dims"])


def net_forward(x, packed, main_fc=False):
    """API parity with the PyTorch module's forward(x, main_fc)."""
    out, out_main = net_forward_both(x, packed)
    return out_main if main_fc else out


# --------------------------------------------------------------------------
# Synthetic params + pure-JAX reference + self-test
# --------------------------------------------------------------------------
def init_params(key, h_sizes, out_size):
    """Deterministic synthetic parameter init (shapes match the PyTorch module)."""
    params = {"hidden": []}
    for k in range(len(h_sizes) - 1):
        fan_in, fan_out = h_sizes[k], h_sizes[k + 1]
        key, kw, kb = jax.random.split(key, 3)
        scale = 1.0 / jnp.sqrt(jnp.float32(fan_in))
        w_t = jax.random.uniform(kw, (fan_in, fan_out), jnp.float32, -scale, scale)
        b = jax.random.uniform(kb, (1, fan_out), jnp.float32, -scale, scale)
        gamma = jnp.ones((1, fan_out), jnp.float32)   # BatchNorm1d weight init
        beta = jnp.zeros((1, fan_out), jnp.float32)   # BatchNorm1d bias init
        params["hidden"].append((w_t, b, gamma, beta))

    fan_in = h_sizes[-1]
    scale = 1.0 / jnp.sqrt(jnp.float32(fan_in))
    for name in ("linear", "linear_main"):
        key, kw, kb = jax.random.split(key, 3)
        w_t = jax.random.uniform(kw, (fan_in, out_size), jnp.float32, -scale, scale)
        b = jax.random.uniform(kb, (1, out_size), jnp.float32, -scale, scale)
        params[name] = (w_t, b)
    return params


def _reference(x, params):
    """Pure-JAX f32 reference of the PyTorch forward (training-mode BN)."""
    h = x.astype(jnp.float32)
    for (w, b, g, bt) in params["hidden"]:
        y = jnp.maximum(h @ w + b, 0.0)
        mean = jnp.mean(y, axis=0, keepdims=True)
        var = jnp.mean((y - mean) ** 2, axis=0, keepdims=True)
        h = (y - mean) / jnp.sqrt(var + BN_EPS) * g + bt
    w_l, b_l = params["linear"]
    w_m, b_m = params["linear_main"]
    return jax.nn.sigmoid(h @ w_l + b_l), jax.nn.sigmoid(h @ w_m + b_m)


if __name__ == "__main__":
    h_sizes = [32, 64, 48]   # two (Linear -> ReLU -> BatchNorm1d) blocks
    out_size = 16
    batch = 10               # not a multiple of 8 -> exercises the BN row mask

    key = jax.random.PRNGKey(0)
    key, kx = jax.random.split(key)
    x = jax.random.normal(kx, (batch, h_sizes[0]), jnp.float32)

    params = init_params(key, h_sizes, out_size)
    packed = pack_params(params)            # hoisted: padding/packing runs once

    out, out_main = net_forward_both(x, packed)
    jax.block_until_ready((out, out_main))

    ref, ref_main = _reference(x, params)

    assert out.shape == (batch, out_size) and out_main.shape == (batch, out_size)
    assert bool(jnp.all((out >= 0.0) & (out <= 1.0)))
    # bf16 MXU operands vs. pure-f32 reference -> 1e-2 tolerance on [0,1] outputs.
    assert bool(jnp.allclose(out, ref, atol=1e-2, rtol=1e-2))
    assert bool(jnp.allclose(out_main, ref_main, atol=1e-2, rtol=1e-2))
    # main_fc API parity check
    assert bool(jnp.allclose(net_forward(x, packed, main_fc=True), out_main))
    print("KERNEL_OK")
</pallas_src>

<mosaic_0001>
module attributes {stable_mosaic.version = 11 : i64} {
  func.func @_mlp_kernel(%arg0: memref<16x32xf32, #tpu.memory_space<vmem>>, %arg1: memref<144x128xbf16, #tpu.memory_space<vmem>>, %arg2: memref<7x128xf32, #tpu.memory_space<vmem>>, %arg3: memref<16x128xf32, #tpu.memory_space<vmem>>) attributes {dimension_semantics = [], scalar_prefetch = 0 : i64, scratch_operands = 0 : i64, tpu.core_type = #tpu.core_type<tc>} {
    %c0 = arith.constant 0 : index
    %c0_0 = arith.constant 0 : index
    %0 = vector.load %arg0[%c0, %c0_0] : memref<16x32xf32, #tpu.memory_space<vmem>>, vector<16x32xf32>
    %c0_1 = arith.constant 0 : index
    %c0_2 = arith.constant 0 : index
    %1 = vector.load %arg2[%c0_1, %c0_2] : memref<7x128xf32, #tpu.memory_space<vmem>>, vector<7x128xf32>
    %2 = tpu.iota {dimensions = array<i32: 0>} : vector<16x1xi32>
    %c10_i32 = arith.constant 10 : i32
    %3 = vector.broadcast %c10_i32 : i32 to vector<16x1xi32>
    %4 = arith.cmpi slt, %2, %3 : vector<16x1xi32>
    %5 = arith.extui %4 : vector<16x1xi1> to vector<16x1xi32>
    %6 = arith.sitofp %5 : vector<16x1xi32> to vector<16x1xf32>
    %c0_3 = arith.constant 0 : index
    %c0_4 = arith.constant 0 : index
    %7 = vector.load %arg1[%c0_3, %c0_4] : memref<144x128xbf16, #tpu.memory_space<vmem>>, vector<32x128xbf16>
    %8 = vector.extract_strided_slice %1 {offsets = [0, 0], sizes = [1, 128], strides = [1, 1]} : vector<7x128xf32> to vector<1x128xf32>
    %9 = vector.extract_strided_slice %1 {offsets = [1, 0], sizes = [1, 128], strides = [1, 1]} : vector<7x128xf32> to vector<1x128xf32>
    %10 = vector.extract_strided_slice %1 {offsets = [2, 0], sizes = [1, 128], strides = [1, 1]} : vector<7x128xf32> to vector<1x128xf32>
    %11 = arith.truncf %0 : vector<16x32xf32> to vector<16x32xbf16>
    %cst = arith.constant dense<0.000000e+00> : vector<16x128xf32>
    %12 = tpu.matmul %11, %7, %cst {dimension_numbers = #tpu.dot_dimension_numbers<[1], [0], [0], [1], [0, 0, 1, 1], [], []>} : vector<16x32xbf16>, vector<32x128xbf16>, vector<16x128xf32> -> vector<16x128xf32>
    %13 = vector.broadcast %8 : vector<1x128xf32> to vector<16x128xf32>
    %14 = arith.addf %12, %13 : vector<16x128xf32>
    %cst_5 = arith.constant 0.000000e+00 : f32
    %15 = vector.broadcast %cst_5 : f32 to vector<16x128xf32>
    %16 = arith.maximumf %14, %15 : vector<16x128xf32>
    %17 = vector.broadcast %6 : vector<16x1xf32> to vector<16x128xf32>
    %18 = arith.mulf %16, %17 : vector<16x128xf32>
    %cst_6 = arith.constant dense<0.000000e+00> : vector<128xf32>
    %19 = vector.multi_reduction <add>, %18, %cst_6 [0] : vector<16x128xf32> to vector<128xf32>
    %20 = vector.shape_cast %19 : vector<128xf32> to vector<1x128xf32>
    %cst_7 = arith.constant 1.000000e-01 : f32
    %21 = vector.broadcast %cst_7 : f32 to vector<1x128xf32>
    %22 = arith.mulf %20, %21 : vector<1x128xf32>
    %23 = vector.broadcast %22 : vector<1x128xf32> to vector<16x128xf32>
    %24 = arith.subf %16, %23 : vector<16x128xf32>
    %25 = vector.broadcast %6 : vector<16x1xf32> to vector<16x128xf32>
    %26 = arith.mulf %24, %25 : vector<16x128xf32>
    %27 = arith.mulf %26, %26 : vector<16x128xf32>
    %cst_8 = arith.constant dense<0.000000e+00> : vector<128xf32>
    %28 = vector.multi_reduction <add>, %27, %cst_8 [0] : vector<16x128xf32> to vector<128xf32>
    %29 = vector.shape_cast %28 : vector<128xf32> to vector<1x128xf32>
    %cst_9 = arith.constant 1.000000e-01 : f32
    %30 = vector.broadcast %cst_9 : f32 to vector<1x128xf32>
    %31 = arith.mulf %29, %30 : vector<1x128xf32>
    %cst_10 = arith.constant 9.99999974E-6 : f32
    %32 = vector.broadcast %cst_10 : f32 to vector<1x128xf32>
    %33 = arith.addf %31, %32 : vector<1x128xf32>
    %34 = math.rsqrt %33 : vector<1x128xf32>
    %35 = arith.mulf %9, %34 : vector<1x128xf32>
    %36 = arith.mulf %22, %35 : vector<1x128xf32>
    %37 = arith.subf %10, %36 : vector<1x128xf32>
    %38 = vector.broadcast %35 : vector<1x128xf32> to vector<16x128xf32>
    %39 = arith.mulf %16, %38 : vector<16x128xf32>
    %40 = vector.broadcast %37 : vector<1x128xf32> to vector<16x128xf32>
    %41 = arith.addf %39, %40 : vector<16x128xf32>
    %c32 = arith.constant 32 : index
    %c0_11 = arith.constant 0 : index
    %42 = vector.load %arg1[%c32, %c0_11] : memref<144x128xbf16, #tpu.memory_space<vmem>>, vector<64x128xbf16>
    %43 = vector.extract_strided_slice %1 {offsets = [3, 0], sizes = [1, 128], strides = [1, 1]} : vector<7x128xf32> to vector<1x128xf32>
    %44 = vector.extract_strided_slice %1 {offsets = [4, 0], sizes = [1, 128], strides = [1, 1]} : vector<7x128xf32> to vector<1x128xf32>
    %45 = vector.extract_strided_slice %1 {offsets = [5, 0], sizes = [1, 128], strides = [1, 1]} : vector<7x128xf32> to vector<1x128xf32>
    %46 = vector.extract_strided_slice %41 {offsets = [0, 0], sizes = [16, 64], strides = [1, 1]} : vector<16x128xf32> to vector<16x64xf32>
    %47 = arith.truncf %46 : vector<16x64xf32> to vector<16x64xbf16>
    %cst_12 = arith.constant dense<0.000000e+00> : vector<16x128xf32>
    %48 = tpu.matmul %47, %42, %cst_12 {dimension_numbers = #tpu.dot_dimension_numbers<[1], [0], [0], [1], [0, 0, 1, 1], [], []>} : vector<16x64xbf16>, vector<64x128xbf16>, vector<16x128xf32> -> vector<16x128xf32>
    %49 = vector.broadcast %43 : vector<1x128xf32> to vector<16x128xf32>
    %50 = arith.addf %48, %49 : vector<16x128xf32>
    %cst_13 = arith.constant 0.000000e+00 : f32
    %51 = vector.broadcast %cst_13 : f32 to vector<16x128xf32>
    %52 = arith.maximumf %50, %51 : vector<16x128xf32>
    %53 = vector.broadcast %6 : vector<16x1xf32> to vector<16x128xf32>
    %54 = arith.mulf %52, %53 : vector<16x128xf32>
    %cst_14 = arith.constant dense<0.000000e+00> : vector<128xf32>
    %55 = vector.multi_reduction <add>, %54, %cst_14 [0] : vector<16x128xf32> to vector<128xf32>
    %56 = vector.shape_cast %55 : vector<128xf32> to vector<1x128xf32>
    %cst_15 = arith.constant 1.000000e-01 : f32
    %57 = vector.broadcast %cst_15 : f32 to vector<1x128xf32>
    %58 = arith.mulf %56, %57 : vector<1x128xf32>
    %59 = vector.broadcast %58 : vector<1x128xf32> to vector<16x128xf32>
    %60 = arith.subf %52, %59 : vector<16x128xf32>
    %61 = vector.broadcast %6 : vector<16x1xf32> to vector<16x128xf32>
    %62 = arith.mulf %60, %61 : vector<16x128xf32>
    %63 = arith.mulf %62, %62 : vector<16x128xf32>
    %cst_16 = arith.constant dense<0.000000e+00> : vector<128xf32>
    %64 = vector.multi_reduction <add>, %63, %cst_16 [0] : vector<16x128xf32> to vector<128xf32>
    %65 = vector.shape_cast %64 : vector<128xf32> to vector<1x128xf32>
    %cst_17 = arith.constant 1.000000e-01 : f32
    %66 = vector.broadcast %cst_17 : f32 to vector<1x128xf32>
    %67 = arith.mulf %65, %66 : vector<1x128xf32>
    %cst_18 = arith.constant 9.99999974E-6 : f32
    %68 = vector.broadcast %cst_18 : f32 to vector<1x128xf32>
    %69 = arith.addf %67, %68 : vector<1x128xf32>
    %70 = math.rsqrt %69 : vector<1x128xf32>
    %71 = arith.mulf %44, %70 : vector<1x128xf32>
    %72 = arith.mulf %58, %71 : vector<1x128xf32>
    %73 = arith.subf %45, %72 : vector<1x128xf32>
    %74 = vector.broadcast %71 : vector<1x128xf32> to vector<16x128xf32>
    %75 = arith.mulf %52, %74 : vector<16x128xf32>
    %76 = vector.broadcast %73 : vector<1x128xf32> to vector<16x128xf32>
    %77 = arith.addf %75, %76 : vector<16x128xf32>
    %c96 = arith.constant 96 : index
    %c0_19 = arith.constant 0 : index
    %78 = vector.load %arg1[%c96, %c0_19] : memref<144x128xbf16, #tpu.memory_space<vmem>>, vector<48x128xbf16>
    %79 = vector.extract_strided_slice %1 {offsets = [6, 0], sizes = [1, 128], strides = [1, 1]} : vector<7x128xf32> to vector<1x128xf32>
    %80 = vector.extract_strided_slice %77 {offsets = [0, 0], sizes = [16, 48], strides = [1, 1]} : vector<16x128xf32> to vector<16x48xf32>
    %81 = arith.truncf %80 : vector<16x48xf32> to vector<16x48xbf16>
    %cst_20 = arith.constant dense<0.000000e+00> : vector<16x128xf32>
    %82 = tpu.matmul %81, %78, %cst_20 {dimension_numbers = #tpu.dot_dimension_numbers<[1], [0], [0], [1], [0, 0, 1, 1], [], []>} : vector<16x48xbf16>, vector<48x128xbf16>, vector<16x128xf32> -> vector<16x128xf32>
    %83 = vector.broadcast %79 : vector<1x128xf32> to vector<16x128xf32>
    %84 = arith.addf %82, %83 : vector<16x128xf32>
    %85 = arith.negf %84 : vector<16x128xf32>
    %86 = math.exp %85 : vector<16x128xf32>
    %cst_21 = arith.constant 1.000000e+00 : f32
    %87 = vector.broadcast %cst_21 : f32 to vector<16x128xf32>
    %88 = arith.addf %87, %86 : vector<16x128xf32>
    %89 = arith.divf %87, %88 : vector<16x128xf32>
    %c0_22 = arith.constant 0 : index
    %c0_23 = arith.constant 0 : index
    %90 = vector.load %arg3[%c0_22, %c0_23] : memref<16x128xf32, #tpu.memory_space<vmem>>, vector<16x128xf32>
    tpu.vector_store %arg3[%c0_22, %c0_23], %89 {strides = array<i32>} : memref<16x128xf32, #tpu.memory_space<vmem>>, vector<16x128xf32>,
    return
  }
}

</mosaic_0001>

<llo_original>
// kernel: _forward_packed.1
$region0: #{_forward_packed.1}
  #allocation0 [shape = 'u32[]', space=smem, size = 0x4, offset = 0x4, fixed_abs, tag = 'smem constant byte address 0x4 - core index']
  #allocation1 [shape = 'u32[144,128]{1,0:T(1,128)}', space=vmem, size = 0x12000, scoped, tag = 'internal scratch']
  %s0 = inlined_call_operand.vmem [shape: f32[16,32], index: 0, kind: input, shape index: {}]
  %s1 = inlined_call_operand.hbm [shape: bf16[144,128], index: 1, kind: input, shape index: {}]
  %s2 = inlined_call_operand.vmem [shape: f32[7,128], index: 2, kind: input, shape index: {}]
  %s3 = inlined_call_operand.vmem [shape: f32[16,128], index: 3, kind: output, shape index: {}]
  %s4 = sld [smem:[#allocation0]]
  $region26: #{_forward_packed.1} parent=0
    _
  %s6 = ssub.s32 1, %s4
  %s7 = scalar_select 0, %s6, %s4
  $region1: #{_forward_packed.1} parent=0
    #allocation2 [shape = 'u8[36864]{0}', space=vmem, size = 0x9000, scoped, tag = 'input window, operand 1, single buffered']
    #allocation3 [shape = 's32[1]{0}', space=sflag, size = 0x4, scoped, tag = 'scoped memory for _forward_packed.1']
    %8 = vsyncpa [#allocation3], 0
    // Predicated region
    $region2: #{_forward_packed.1} parent=1 // pred_check
      _
    $region3: #{_forward_packed.1} parent=1 // pred_check_branch
      %10 = sbr.rel (0) target = $region5
    $region4: #{_forward_packed.1} parent=1 // pred_region
      _
    $region5: #{_forward_packed.1} parent=1 // pred_fallthru
      _
    // Predicated region
    $region6: #{_forward_packed.1} parent=1 // pred_check
      _
    $region7: #{_forward_packed.1} parent=1 // pred_check_branch
      %12 = sbr.rel (0) target = $region9
    $region8: #{_forward_packed.1} parent=1 // pred_region
      %s14 = ssub.s32 1152, 1152
      %15 = vsyncadd [#allocation3], %s14
      %s16 = sshll.u32 [#allocation2], 4
      %s17 = int_to_ptr.vmem [resolvable:$true] %s16
      %22 = dma.hbm_to_vmem [thread:$0]  %s1, 1152, %s17, [#allocation3], 64, 64, 4
    $region9: #{_forward_packed.1} parent=1 // pred_fallthru
      _
    // Predicated region
    $region10: #{_forward_packed.1} parent=1 // pred_check
      _
    $region11: #{_forward_packed.1} parent=1 // pred_check_branch
      %24 = sbr.rel (0) target = $region13
    $region12: #{_forward_packed.1} parent=1 // pred_region
      _
    $region13: #{_forward_packed.1} parent=1 // pred_fallthru
      _
    // Predicated region
    $region14: #{_forward_packed.1} parent=1 // pred_check
      _
    $region15: #{_forward_packed.1} parent=1 // pred_check_branch
      %26 = sbr.rel (0) target = $region17
    $region16: #{_forward_packed.1} parent=1 // pred_region
      %27 = dma.done [#allocation3], 1152
    $region17: #{_forward_packed.1} parent=1 // pred_fallthru
      _
    %v29 = vld [vmem:[%s0] sm:$0xff]
    %v30 = vld [vmem:[%s0 + $0x8] sm:$0xff]
    %v31 = vld [vmem:[%s2] sm:$0x7f]
    %v32 = vlaneseq
    %v33 = vshrl.u32 %v32, 7
    %v34 = vadd.s32 %v33, 8
    %vm35 = vcmp.lt.s32.totalorder %v33, 10
    %vm36 = vcmp.lt.s32.totalorder %v34, 10
    %v37 = vsel %vm35, 1, 0
    %v38 = vsel %vm36, 1, 0
    %v39 = vcvt.s32.f32 %v37
    %v40 = vcvt.s32.f32 %v38
    %v41 = vld [vmem:[#allocation2] sm:$0xf]
    %v42 = vld [vmem:[#allocation2 + $0x4] sm:$0xf]
    %v43 = vld [vmem:[#allocation2 + $0x8] sm:$0xf]
    %v44 = vld [vmem:[#allocation2 + $0xc] sm:$0xf]
    %v45 = vpack.c.bf16 %v30, %v29
    %v46 = vlaneseq
    %v47 = vshrl.u32 %v46, 7
    %v48 = vsub.s32 0, %v47
    %v49 = vrot.slane %v31, %v48
    %v54 = vunpack.c.l.b16 %v41
    %v55 = vunpack.c.l.b16 %v42
    %v56 = vunpack.c.l.b16 %v43
    %v57 = vunpack.c.l.b16 %v44
    %v58 = vpack.c.b16 %v55, %v54
    %v59 = vpack.c.b16 %v57, %v56
    %vm62 = vcmask 261120
    %v64 = vsel %vm62, %v45, 0
    %66 = vmatprep.subr.bf16.mxu0 0
    %67 = vmatpush1.bf16.msra.mxu0 0
    %68 = vmatprep.subr.bf16.mxu0 0
    %69 = vmatpush1.bf16.msra.mxu0 0
    %70 = vmatprep.subr.bf16.mxu0 0
    %71 = vmatpush1.bf16.msra.mxu0 0
    %72 = vmatprep.subr.bf16.mxu0 0
    %73 = vmatpush1.bf16.msra.mxu0 0
    %74 = vmatprep.subr.bf16.mxu0 0
    %75 = vmatpush1.bf16.msra.mxu0 0
    %76 = vmatprep.subr.bf16.mxu0 0
    %77 = vmatpush1.bf16.msra.mxu0 0
    %78 = vmatprep.subr.bf16.mxu0 0
    %79 = vmatpush1.bf16.msra.mxu0 %v59
    %80 = vmatprep.subr.bf16.mxu0 0
    %81 = vmatpush1.bf16.msra.mxu0 %v58
    %82 = vmatprep.subr.bf16.mxu0 0
    %83 = vmatpush2.bf16.msra.mxu0 0
    %84 = vmatprep.subr.bf16.mxu0 0
    %85 = vmatpush2.bf16.msra.mxu0 0
    %86 = vmatprep.subr.bf16.mxu0 0
    %87 = vmatpush2.bf16.msra.mxu0 0
    %88 = vmatprep.subr.bf16.mxu0 0
    %89 = vmatpush2.bf16.msra.mxu0 0
    %90 = vmatprep.subr.bf16.mxu0 0
    %91 = vmatpush2.bf16.msra.mxu0 0
    %92 = vmatprep.subr.bf16.mxu0 0
    %93 = vmatpush2.bf16.msra.mxu0 0
    %94 = vmatprep.subr.bf16.mxu0 0
    %95 = vmatpush2.bf16.msra.mxu0 0
    %96 = vmatprep.subr.bf16.mxu0 0
    %97 = vmatpush2.bf16.msra.mxu0 0
    %98 = vmatprep.mubr.bf16.mxu0 0
    %99 = vmatmul.mubr.bf16.gmra.mxu0 %v64
    %v100 = vpop.f32.mrf.mxu0
    %v101 = vadd.f32 %v49, %v100
    %v102 = vpop.f32.mrf.mxu0
    %v103 = vpop.f32.mrf.mxu0
    %v104 = vadd.f32 %v49, %v103
    %v105 = vpop.f32.mrf.mxu0
    %106 = vdwg.mxu0
    %v107 = vmax.f32 %v101, 0.0
    %v108 = vmax.f32 %v104, 0.0
    %v109 = vmul.f32 %v107, %v39
    %v110 = vmul.f32 %v108, %v40
    %v111 = vadd.f32 %v109, %v110
    %v112 = vrot.slane %v111, 4
    %v113 = vadd.f32 %v111, %v112
    %v114 = vrot.slane %v113, 2
    %v115 = vadd.f32 %v113, %v114
    %v116 = vrot.slane %v115, 1
    %v117 = vadd.f32 %v115, %v116
    %v118 = vmul.f32 %v117, 0.1
    %v119 = vsub.f32 %v107, %v118
    %v120 = vsub.f32 %v108, %v118
    %v121 = vmul.f32 %v119, %v39
    %v122 = vmul.f32 %v120, %v40
    %v123 = vmul.f32 %v121, %v121
    %v124 = vmul.f32 %v122, %v122
    %v125 = vadd.f32 %v123, %v124
    %v126 = vrot.slane %v125, 4
    %v127 = vadd.f32 %v125, %v126
    %v128 = vrot.slane %v127, 2
    %v129 = vadd.f32 %v127, %v128
    %v130 = vrot.slane %v129, 1
    %v131 = vadd.f32 %v129, %v130
    %v132 = vmul.f32 %v131, 0.1
    %v133 = vadd.f32 %v132, 1e-05
    %v134 = vrsqrt.pop %v133
    %v135 = vmul.f32 %v31, %v134
    %v136 = vmul.f32 %v118, %v135
    %v138 = vrot.slane %v136, 7
    %v140 = vsub.f32 %v31, %v138
    %v141 = vlaneseq
    %v142 = vshrl.u32 %v141, 7
    %v143 = vsub.s32 1, %v142
    %v144 = vrot.slane %v135, %v143
    %v145 = vmul.f32 %v107, %v144
    %v146 = vmul.f32 %v108, %v144
    %v147 = vlaneseq
    %v148 = vshrl.u32 %v147, 7
    %v149 = vsub.s32 2, %v148
    %v150 = vrot.slane %v140, %v149
    %v151 = vadd.f32 %v145, %v150
    %v152 = vadd.f32 %v146, %v150
    %v153 = vld [vmem:[#allocation2 + $0x10] sm:$0xf]
    %v154 = vld [vmem:[#allocation2 + $0x14] sm:$0xf]
    %v155 = vld [vmem:[#allocation2 + $0x18] sm:$0xf]
    %v156 = vld [vmem:[#allocation2 + $0x1c] sm:$0xf]
    %v157 = vld [vmem:[#allocation2 + $0x20] sm:$0xf]
    %v158 = vld [vmem:[#allocation2 + $0x24] sm:$0xf]
    %v159 = vld [vmem:[#allocation2 + $0x28] sm:$0xf]
    %v160 = vld [vmem:[#allocation2 + $0x2c] sm:$0xf]
    %v161 = vpack.c.bf16 %v152, %v151
    %v162 = vlaneseq
    %v163 = vshrl.u32 %v162, 7
    %v164 = vsub.s32 3, %v163
    %v165 = vrot.slane %v31, %v164
    %v174 = vunpack.c.l.b16 %v153
    %v175 = vunpack.c.l.b16 %v154
    %v176 = vunpack.c.l.b16 %v155
    %v177 = vunpack.c.l.b16 %v156
    %v178 = vunpack.c.l.b16 %v157
    %v179 = vunpack.c.l.b16 %v158
    %v180 = vunpack.c.l.b16 %v159
    %v181 = vunpack.c.l.b16 %v160
    %v182 = vpack.c.b16 %v175, %v174
    %v183 = vpack.c.b16 %v177, %v176
    %v184 = vpack.c.b16 %v179, %v178
    %v185 = vpack.c.b16 %v181, %v180
    %vm190 = vcmask 523264
    %v192 = vsel %vm190, %v161, 0
    %194 = vmatprep.subr.bf16.mxu0 0
    %195 = vmatpush1.bf16.msra.mxu0 0
    %196 = vmatprep.subr.bf16.mxu0 0
    %197 = vmatpush1.bf16.msra.mxu0 0
    %198 = vmatprep.subr.bf16.mxu0 0
    %199 = vmatpush1.bf16.msra.mxu0 0
    %200 = vmatprep.subr.bf16.mxu0 0
    %201 = vmatpush1.bf16.msra.mxu0 0
    %202 = vmatprep.subr.bf16.mxu0 0
    %203 = vmatpush1.bf16.msra.mxu0 %v185
    %204 = vmatprep.subr.bf16.mxu0 0
    %205 = vmatpush1.bf16.msra.mxu0 %v184
    %206 = vmatprep.subr.bf16.mxu0 0
    %207 = vmatpush1.bf16.msra.mxu0 %v183
    %208 = vmatprep.subr.bf16.mxu0 0
    %209 = vmatpush1.bf16.msra.mxu0 %v182
    %210 = vmatprep.subr.bf16.mxu0 0
    %211 = vmatpush2.bf16.msra.mxu0 0
    %212 = vmatprep.subr.bf16.mxu0 0
    %213 = vmatpush2.bf16.msra.mxu0 0
    %214 = vmatprep.subr.bf16.mxu0 0
    %215 = vmatpush2.bf16.msra.mxu0 0
    %216 = vmatprep.subr.bf16.mxu0 0
    %217 = vmatpush2.bf16.msra.mxu0 0
    %218 = vmatprep.subr.bf16.mxu0 0
    %219 = vmatpush2.bf16.msra.mxu0 0
    %220 = vmatprep.subr.bf16.mxu0 0
    %221 = vmatpush2.bf16.msra.mxu0 0
    %222 = vmatprep.subr.bf16.mxu0 0
    %223 = vmatpush2.bf16.msra.mxu0 0
    %224 = vmatprep.subr.bf16.mxu0 0
    %225 = vmatpush2.bf16.msra.mxu0 0
    %226 = vmatprep.mubr.bf16.mxu0 0
    %227 = vmatmul.mubr.bf16.gmra.mxu0 %v192
    %v228 = vpop.f32.mrf.mxu0
    %v229 = vadd.f32 %v165, %v228
    %v230 = vpop.f32.mrf.mxu0
    %v231 = vpop.f32.mrf.mxu0
    %v232 = vadd.f32 %v165, %v231
    %v233 = vpop.f32.mrf.mxu0
    %234 = vdwg.mxu0
    %v235 = vmax.f32 %v229, 0.0
    %v236 = vmax.f32 %v232, 0.0
    %v237 = vmul.f32 %v235, %v39
    %v238 = vmul.f32 %v236, %v40
    %v239 = vadd.f32 %v237, %v238
    %v240 = vrot.slane %v239, 4
    %v241 = vadd.f32 %v239, %v240
    %v242 = vrot.slane %v241, 2
    %v243 = vadd.f32 %v241, %v242
    %v244 = vrot.slane %v243, 1
    %v245 = vadd.f32 %v243, %v244
    %v246 = vmul.f32 %v245, 0.1
    %v247 = vsub.f32 %v235, %v246
    %v248 = vsub.f32 %v236, %v246
    %v249 = vmul.f32 %v247, %v39
    %v250 = vmul.f32 %v248, %v40
    %v251 = vmul.f32 %v249, %v249
    %v252 = vmul.f32 %v250, %v250
    %v253 = vadd.f32 %v251, %v252
    %v254 = vrot.slane %v253, 4
    %v255 = vadd.f32 %v253, %v254
    %v256 = vrot.slane %v255, 2
    %v257 = vadd.f32 %v255, %v256
    %v258 = vrot.slane %v257, 1
    %v259 = vadd.f32 %v257, %v258
    %v260 = vmul.f32 %v259, 0.1
    %v261 = vadd.f32 %v260, 1e-05
    %v262 = vrsqrt.pop %v261
    %v263 = vmul.f32 %v31, %v262
    %v264 = vmul.f32 %v246, %v263
    %v266 = vrot.slane %v264, 7
    %v268 = vsub.f32 %v31, %v266
    %v269 = vlaneseq
    %v270 = vshrl.u32 %v269, 7
    %v271 = vsub.s32 4, %v270
    %v272 = vrot.slane %v263, %v271
    %v273 = vmul.f32 %v235, %v272
    %v274 = vmul.f32 %v236, %v272
    %v275 = vlaneseq
    %v276 = vshrl.u32 %v275, 7
    %v277 = vsub.s32 5, %v276
    %v278 = vrot.slane %v268, %v277
    %v279 = vadd.f32 %v273, %v278
    %v280 = vadd.f32 %v274, %v278
    %v281 = vld [vmem:[#allocation2 + $0x30] sm:$0xf]
    %v282 = vld [vmem:[#allocation2 + $0x34] sm:$0xf]
    %v283 = vld [vmem:[#allocation2 + $0x38] sm:$0xf]
    %v284 = vld [vmem:[#allocation2 + $0x3c] sm:$0xf]
    %v285 = vld [vmem:[#allocation2 + $0x40] sm:$0xf]
    %v286 = vld [vmem:[#allocation2 + $0x44] sm:$0xf]
    %v287 = vpack.c.bf16 %v280, %v279
    %v288 = vlaneseq
    %v289 = vshrl.u32 %v288, 7
    %v290 = vsub.s32 6, %v289
    %v291 = vrot.slane %v31, %v290
    %v298 = vunpack.c.l.b16 %v281
    %v299 = vunpack.c.l.b16 %v282
    %v300 = vunpack.c.l.b16 %v283
    %v301 = vunpack.c.l.b16 %v284
    %v302 = vunpack.c.l.b16 %v285
    %v303 = vunpack.c.l.b16 %v286
    %v304 = vpack.c.b16 %v299, %v298
    %v305 = vpack.c.b16 %v301, %v300
    %v306 = vpack.c.b16 %v303, %v302
    %vm310 = vcmask 392192
    %v312 = vsel %vm310, %v287, 0
    %314 = vmatprep.subr.bf16.mxu0 0
    %315 = vmatpush1.bf16.msra.mxu0 0
    %316 = vmatprep.subr.bf16.mxu0 0
    %317 = vmatpush1.bf16.msra.mxu0 0
    %318 = vmatprep.subr.bf16.mxu0 0
    %319 = vmatpush1.bf16.msra.mxu0 0
    %320 = vmatprep.subr.bf16.mxu0 0
    %321 = vmatpush1.bf16.msra.mxu0 0
    %322 = vmatprep.subr.bf16.mxu0 0
    %323 = vmatpush1.bf16.msra.mxu0 0
    %324 = vmatprep.subr.bf16.mxu0 0
    %325 = vmatpush1.bf16.msra.mxu0 %v306
    %326 = vmatprep.subr.bf16.mxu0 0
    %327 = vmatpush1.bf16.msra.mxu0 %v305
    %328 = vmatprep.subr.bf16.mxu0 0
    %329 = vmatpush1.bf16.msra.mxu0 %v304
    %330 = vmatprep.subr.bf16.mxu0 0
    %331 = vmatpush2.bf16.msra.mxu0 0
    %332 = vmatprep.subr.bf16.mxu0 0
    %333 = vmatpush2.bf16.msra.mxu0 0
    %334 = vmatprep.subr.bf16.mxu0 0
    %335 = vmatpush2.bf16.msra.mxu0 0
    %336 = vmatprep.subr.bf16.mxu0 0
    %337 = vmatpush2.bf16.msra.mxu0 0
    %338 = vmatprep.subr.bf16.mxu0 0
    %339 = vmatpush2.bf16.msra.mxu0 0
    %340 = vmatprep.subr.bf16.mxu0 0
    %341 = vmatpush2.bf16.msra.mxu0 0
    %342 = vmatprep.subr.bf16.mxu0 0
    %343 = vmatpush2.bf16.msra.mxu0 0
    %344 = vmatprep.subr.bf16.mxu0 0
    %345 = vmatpush2.bf16.msra.mxu0 0
    %346 = vmatprep.mubr.bf16.mxu0 0
    %347 = vmatmul.mubr.bf16.gmra.mxu0 %v312
    %v348 = vpop.f32.mrf.mxu0
    %v349 = vadd.f32 %v291, %v348
    %v350 = vpop.f32.mrf.mxu0
    %v351 = vpop.f32.mrf.mxu0
    %v352 = vadd.f32 %v291, %v351
    %v353 = vpop.f32.mrf.mxu0
    %354 = vdwg.mxu0
    %v355 = vxor.u32 %v349, 2147483648
    %v356 = vxor.u32 %v352, 2147483648
    %v357 = vmul.f32 %v355, 1.442695
    %v358 = vpow.pop %v357
    %v359 = vmul.f32 %v356, 1.442695
    %v360 = vpow.pop %v359
    %v361 = vadd.f32 %v358, 1.0
    %v362 = vadd.f32 %v360, 1.0
    %v363 = vrcp.pop %v361
    %v364 = vmul.f32 1.0, %v363
    %v365 = vrcp.pop %v362
    %v366 = vmul.f32 1.0, %v365
    %367 = vst [vmem:[%s3] sm:$0xff] %v364
    %368 = vst [vmem:[%s3 + $0x8] sm:$0xff] %v366
    // Predicated region
    $region18: #{_forward_packed.1} parent=1 // pred_check
      _
    $region19: #{_forward_packed.1} parent=1 // pred_check_branch
      %370 = sbr.rel (0) target = $region21
    $region20: #{_forward_packed.1} parent=1 // pred_region
      _
    $region21: #{_forward_packed.1} parent=1 // pred_fallthru
      _
    // Predicated region
    $region22: #{_forward_packed.1} parent=1 // pred_check
      _
    $region23: #{_forward_packed.1} parent=1 // pred_check_branch
      %372 = sbr.rel (0) target = $region25
    $region24: #{_forward_packed.1} parent=1 // pred_region
      _
    $region25: #{_forward_packed.1} parent=1 // pred_fallthru
      _
    %373 = vsyncpa [#allocation3], 1

</llo_original>
